<compile_context>
chip_gen: v5e
topology: v5e:2x2
jax: 0.10.0
libtpu: 0.0.40
codegen_flags: <defaults>
</compile_context>

<pallas_src>
import functools

import jax
import jax.numpy as jnp
from jax import lax
from jax.experimental import pallas as pl
from jax.experimental.pallas import tpu as pltpu


def _basic_block_kernel(x_ref, mask_ref, w1_ref, w2_ref, b1_ref, b2_ref,
                        out_ref, *, W, im2col_dtype, matmul_dtype):
    """One grid step processes `B_tile` images.

    x_ref   : (B_tile, Cp, HW)  input, padded channels on sublanes, flat
                                 spatial (multiple of 128) on lanes
    mask_ref: (9, HW)           precomputed 0/1 halo-validity masks per tap
    w1_ref  : (Cp, 9*Cp)        conv1 weight, im2col layout, BN1 scale folded
    w2_ref  : (Cp, 9*Cp)        conv2 weight, im2col layout, BN2 scale folded
    b1/b2   : (Cp, 1)           folded BN bias (per output channel)
    out_ref : (B_tile, Cp, HW)
    """
    B_tile, Cp, HW = x_ref.shape

    # Grid-invariant operands: load once per step, reuse for every image and
    # for both convs (masks are precomputed in the wrapper, so there is no
    # in-kernel iota/mod/compare work at all).
    m_all = mask_ref[...]                                    # (9, HW)
    masks = [m_all[t:t + 1, :] for t in range(9)]            # nine (1, HW) rows
    w1 = w1_ref[...]
    w2 = w2_ref[...]
    b1 = b1_ref[...]
    b2 = b2_ref[...]

    shifts = [oy * W + ox for oy in (-1, 0, 1) for ox in (-1, 0, 1)]

    def im2col(img):
        """(Cp, HW) -> (9*Cp, HW) patch matrix via masked circular lane rolls."""
        taps = []
        for t, s in enumerate(shifts):
            if s == 0:
                taps.append(img)                             # center tap, no mask
            else:
                shifted = pltpu.roll(img, (-s) % HW, axis=1)  # XLU slot
                taps.append(shifted * masks[t])
        return jnp.concatenate(taps, axis=0)                 # whole-sublane stacking

    # Small static trip count: unrolled Python loop over the images in this
    # block (amortizes the ~600-cycle per-grid-step cost and weight residency).
    for i in range(B_tile):
        x = x_ref[i].astype(jnp.float32)                     # (Cp, HW) residual

        # conv1 (3x3, pad=1, no bias) + bn1 (scale in w1) + relu; dropout1 = id
        p1 = im2col(x.astype(im2col_dtype))                  # (9*Cp, HW)
        h1 = jnp.dot(w1, p1.astype(matmul_dtype),
                     preferred_element_type=jnp.float32)     # (Cp, HW) f32
        h1 = jnp.maximum(h1 + b1, 0.0)

        # conv2 (3x3, pad=1, no bias) + bn2 (scale in w2); dropout2 = identity
        p2 = im2col(h1.astype(im2col_dtype))                 # (9*Cp, HW)
        h2 = jnp.dot(w2, p2.astype(matmul_dtype),
                     preferred_element_type=jnp.float32)     # (Cp, HW) f32
        h2 = h2 + b2

        # residual add (identity branch) + relu
        out_ref[i] = jnp.maximum(h2 + x, 0.0).astype(out_ref.dtype)


def basic_block(x_nchw, w1_oihw, w2_oihw, bn1, bn2, eps=1e-5,
                matmul_dtype=jnp.float32, im2col_dtype=None, batch_tile=None):
    """BasicBlock forward (stride=1, downsample=None, eval mode).

    x_nchw : (N, Cin, H, W) float32   (PyTorch layout at the boundary)
    w*_oihw: (Cout, Cin, 3, 3)        (PyTorch conv weight layout)
    bn*    : (gamma, beta, running_mean, running_var), each (Cout,)
    returns: (N, Cout, H, W)

    im2col_dtype: f32 (default, required on v5e) or bf16 (v6e/v7x: packed
                  rolls/selects).  Matmuls always accumulate in f32.
    """
    N, Cin, H, W = x_nchw.shape
    Cout = w1_oihw.shape[0]
    assert Cin == Cout, "identity residual path requires Cin == Cout"
    HW = H * W
    if im2col_dtype is None:
        im2col_dtype = jnp.float32

    # Pad channels to the sublane multiple of the im2col compute dtype so the
    # im2col taps stack into whole sublane tiles.
    sub = 8 * (4 // jnp.dtype(im2col_dtype).itemsize)        # 8 f32 / 16 bf16
    Cp = ((Cout + sub - 1) // sub) * sub

    # ---- per-step working-set estimate -> batch tile + VMEM budget ---------
    itc = jnp.dtype(im2col_dtype).itemsize
    per_image = (2 * Cp * HW * 4                 # x block + out block (f32)
                 + 2 * 9 * Cp * HW * itc         # two im2col patch matrices
                 + 4 * Cp * HW * 4)              # f32 temporaries (rough)
    if batch_tile is None:
        # keep a parallel grid axis of extent >= 2 when possible (v7x 2 TCs),
        # while still amortizing step overhead for larger N
        batch_tile = N // 2 if (N >= 2 and N % 2 == 0) else 1
        cap = max(1, (4 << 20) // per_image)     # keep per-step tile modest
        batch_tile = max(1, min(batch_tile, cap))
        while N % batch_tile:
            batch_tile -= 1
    assert N % batch_tile == 0
    grid = N // batch_tile

    weights_bytes = 2 * Cp * 9 * Cp * jnp.dtype(matmul_dtype).itemsize
    est = 4 * batch_tile * per_image + 2 * weights_bytes + 9 * HW * itc
    vmem_limit = int(min(64 << 20, max(32 << 20, 2 * est)))

    # ---- fold BN (eval affine): scale into conv weights, bias kept separate -
    def fold_bn(p):
        gamma, beta, mean, var = p
        scale = gamma / jnp.sqrt(var + eps)
        bias = beta - mean * scale
        bias = jnp.pad(bias, (0, Cp - Cout)).reshape(Cp, 1).astype(jnp.float32)
        return scale, bias

    s1, b1 = fold_bn(bn1)
    s2, b2 = fold_bn(bn2)

    def prep_weight(w_oihw, scale, cin):
        w = w_oihw.astype(jnp.float32) * scale[:, None, None, None]
        w = jnp.pad(w, ((0, Cp - Cout), (0, Cp - cin), (0, 0), (0, 0)))
        # OIHW -> (Cp, ky, kx, cinp) -> (Cp, 9*Cp)   (tap-major, cin-minor)
        return (jnp.transpose(w, (0, 2, 3, 1))
                .reshape(Cp, 9 * Cp).astype(matmul_dtype))

    w1_mat = prep_weight(w1_oihw, s1, Cin)
    w2_mat = prep_weight(w2_oihw, s2, Cout)

    # ---- precomputed 3x3 halo-validity masks (shared by both convs) --------
    col = jnp.arange(HW, dtype=jnp.int32) % W
    row = jnp.arange(HW, dtype=jnp.int32) // W
    mask_rows = [((col + ox >= 0) & (col + ox < W) &
                  (row + oy >= 0) & (row + oy < H))
                 for oy in (-1, 0, 1) for ox in (-1, 0, 1)]
    masks = jnp.stack(mask_rows, axis=0).astype(im2col_dtype)   # (9, HW)

    # ---- input: NCHW -> (N, Cp, HW), channels zero-padded ------------------
    x_flat = x_nchw.reshape(N, Cin, HW)
    if Cp != Cin:
        x_flat = jnp.pad(x_flat, ((0, 0), (0, Cp - Cin), (0, 0)))

    kernel = functools.partial(_basic_block_kernel, W=W,
                               im2col_dtype=im2col_dtype,
                               matmul_dtype=matmul_dtype)

    out_flat = pl.pallas_call(
        kernel,
        out_shape=jax.ShapeDtypeStruct((N, Cp, HW), x_nchw.dtype),
        grid_spec=pltpu.PrefetchScalarGridSpec(
            num_scalar_prefetch=0,
            grid=(grid,),
            in_specs=[
                pl.BlockSpec((batch_tile, Cp, HW), lambda g: (g, 0, 0)),
                pl.BlockSpec((9, HW), lambda g: (0, 0)),
                pl.BlockSpec((Cp, 9 * Cp), lambda g: (0, 0)),
                pl.BlockSpec((Cp, 9 * Cp), lambda g: (0, 0)),
                pl.BlockSpec((Cp, 1), lambda g: (0, 0)),
                pl.BlockSpec((Cp, 1), lambda g: (0, 0)),
            ],
            out_specs=pl.BlockSpec((batch_tile, Cp, HW), lambda g: (g, 0, 0)),
        ),
        compiler_params=pltpu.CompilerParams(
            dimension_semantics=("parallel",),
            vmem_limit_bytes=vmem_limit),
    )(x_flat, masks, w1_mat, w2_mat, b1, b2)

    return out_flat[:, :Cout, :].reshape(N, Cout, H, W)


def reference_basic_block(x, w1, w2, bn1, bn2, eps=1e-5):
    """Pure-JAX reference (matches PyTorch eval-mode semantics)."""
    def conv(a, w):
        return lax.conv_general_dilated(
            a, w, window_strides=(1, 1), padding=((1, 1), (1, 1)),
            dimension_numbers=("NCHW", "OIHW", "NCHW"))

    def bn(a, p):
        g, b, m, v = (t[None, :, None, None] for t in p)
        return g * (a - m) / jnp.sqrt(v + eps) + b

    out = jax.nn.relu(bn(conv(x, w1), bn1))
    out = bn(conv(out, w2), bn2)
    return jax.nn.relu(out + x)


if __name__ == "__main__":
    N, C, H, W = 2, 4, 16, 16          # in_channel = out_channel = 4, stride = 1
    key = jax.random.PRNGKey(0)
    kx, kw1, kw2, kg1, kb1, km1, kv1, kg2, kb2, km2, kv2 = jax.random.split(key, 11)

    x = jax.random.normal(kx, (N, C, H, W), jnp.float32)
    w1 = jax.random.normal(kw1, (C, C, 3, 3), jnp.float32) * 0.1
    w2 = jax.random.normal(kw2, (C, C, 3, 3), jnp.float32) * 0.1
    bn1 = (1.0 + 0.1 * jax.random.normal(kg1, (C,), jnp.float32),
           0.1 * jax.random.normal(kb1, (C,), jnp.float32),
           0.1 * jax.random.normal(km1, (C,), jnp.float32),
           jax.random.uniform(kv1, (C,), jnp.float32, 0.5, 1.5))
    bn2 = (1.0 + 0.1 * jax.random.normal(kg2, (C,), jnp.float32),
           0.1 * jax.random.normal(kb2, (C,), jnp.float32),
           0.1 * jax.random.normal(km2, (C,), jnp.float32),
           jax.random.uniform(kv2, (C,), jnp.float32, 0.5, 1.5))

    ref = reference_basic_block(x, w1, w2, bn1, bn2)

    # 1) Default: f32 path, batch_tile keeps a 2-way parallel grid (exact)
    out = jax.block_until_ready(basic_block(x, w1, w2, bn1, bn2))
    assert out.shape == (N, C, H, W)
    assert jnp.allclose(out, ref, atol=1e-4, rtol=1e-4), \
        f"f32 max err {jnp.max(jnp.abs(out - ref))}"

    # 2) Amortized path: both images in one grid step (exact)
    out_bt = jax.block_until_ready(
        basic_block(x, w1, w2, bn1, bn2, batch_tile=N))
    assert jnp.allclose(out_bt, ref, atol=1e-4, rtol=1e-4), \
        f"batched-tile max err {jnp.max(jnp.abs(out_bt - ref))}"

    # 3) v6e/v7x-style bf16 im2col + bf16 matmul inputs, f32 accumulation
    out_bf16 = jax.block_until_ready(
        basic_block(x, w1, w2, bn1, bn2,
                    matmul_dtype=jnp.bfloat16, im2col_dtype=jnp.bfloat16))
    assert jnp.allclose(out_bf16, ref, atol=5e-2, rtol=5e-2), \
        f"bf16 max err {jnp.max(jnp.abs(out_bf16 - ref))}"

    print("KERNEL_OK")
</pallas_src>

<mosaic_0001>
module attributes {stable_mosaic.version = 11 : i64} {
  func.func @_basic_block_kernel(%arg0: i32, %arg1: memref<1x8x256xf32, #tpu.memory_space<vmem>>, %arg2: memref<9x256xf32, #tpu.memory_space<vmem>>, %arg3: memref<8x72xf32, #tpu.memory_space<vmem>>, %arg4: memref<8x72xf32, #tpu.memory_space<vmem>>, %arg5: memref<8x1xf32, #tpu.memory_space<vmem>>, %arg6: memref<8x1xf32, #tpu.memory_space<vmem>>, %arg7: memref<1x8x256xf32, #tpu.memory_space<vmem>>) attributes {dimension_semantics = [#tpu.dimension_semantics<parallel>], iteration_bounds = array<i64: 2>, scalar_prefetch = 0 : i64, scratch_operands = 0 : i64, tpu.core_type = #tpu.core_type<tc>, window_params = [{transform_indices = @transform_0, window_bounds = array<i64: 1, 8, 256>}, {pipeline_mode = #tpu.pipeline_mode<synchronous>, transform_indices = @transform_1, window_bounds = array<i64: 9, 256>}, {pipeline_mode = #tpu.pipeline_mode<synchronous>, transform_indices = @transform_2, window_bounds = array<i64: 8, 72>}, {pipeline_mode = #tpu.pipeline_mode<synchronous>, transform_indices = @transform_3, window_bounds = array<i64: 8, 72>}, {pipeline_mode = #tpu.pipeline_mode<synchronous>, transform_indices = @transform_4, window_bounds = array<i64: 8, 1>}, {pipeline_mode = #tpu.pipeline_mode<synchronous>, transform_indices = @transform_5, window_bounds = array<i64: 8, 1>}, {transform_indices = @transform_6, window_bounds = array<i64: 1, 8, 256>}]} {
    %c0 = arith.constant 0 : index
    %c0_0 = arith.constant 0 : index
    %0 = vector.load %arg2[%c0, %c0_0] : memref<9x256xf32, #tpu.memory_space<vmem>>, vector<9x256xf32>
    %1 = vector.extract_strided_slice %0 {offsets = [0, 0], sizes = [1, 256], strides = [1, 1]} : vector<9x256xf32> to vector<1x256xf32>
    %2 = vector.extract_strided_slice %0 {offsets = [1, 0], sizes = [1, 256], strides = [1, 1]} : vector<9x256xf32> to vector<1x256xf32>
    %3 = vector.extract_strided_slice %0 {offsets = [2, 0], sizes = [1, 256], strides = [1, 1]} : vector<9x256xf32> to vector<1x256xf32>
    %4 = vector.extract_strided_slice %0 {offsets = [3, 0], sizes = [1, 256], strides = [1, 1]} : vector<9x256xf32> to vector<1x256xf32>
    %5 = vector.extract_strided_slice %0 {offsets = [5, 0], sizes = [1, 256], strides = [1, 1]} : vector<9x256xf32> to vector<1x256xf32>
    %6 = vector.extract_strided_slice %0 {offsets = [6, 0], sizes = [1, 256], strides = [1, 1]} : vector<9x256xf32> to vector<1x256xf32>
    %7 = vector.extract_strided_slice %0 {offsets = [7, 0], sizes = [1, 256], strides = [1, 1]} : vector<9x256xf32> to vector<1x256xf32>
    %8 = vector.extract_strided_slice %0 {offsets = [8, 0], sizes = [1, 256], strides = [1, 1]} : vector<9x256xf32> to vector<1x256xf32>
    %c0_1 = arith.constant 0 : index
    %c0_2 = arith.constant 0 : index
    %9 = vector.load %arg3[%c0_1, %c0_2] : memref<8x72xf32, #tpu.memory_space<vmem>>, vector<8x72xf32>
    %c0_3 = arith.constant 0 : index
    %c0_4 = arith.constant 0 : index
    %10 = vector.load %arg4[%c0_3, %c0_4] : memref<8x72xf32, #tpu.memory_space<vmem>>, vector<8x72xf32>
    %c0_5 = arith.constant 0 : index
    %c0_6 = arith.constant 0 : index
    %11 = vector.load %arg5[%c0_5, %c0_6] : memref<8x1xf32, #tpu.memory_space<vmem>>, vector<8x1xf32>
    %c0_7 = arith.constant 0 : index
    %c0_8 = arith.constant 0 : index
    %12 = vector.load %arg6[%c0_7, %c0_8] : memref<8x1xf32, #tpu.memory_space<vmem>>, vector<8x1xf32>
    %c0_9 = arith.constant 0 : index
    %c0_10 = arith.constant 0 : index
    %c0_11 = arith.constant 0 : index
    %13 = vector.load %arg1[%c0_9, %c0_10, %c0_11] : memref<1x8x256xf32, #tpu.memory_space<vmem>>, vector<1x8x256xf32>
    %14 = vector.shape_cast %13 : vector<1x8x256xf32> to vector<8x256xf32>
    %c17_i32 = arith.constant 17 : i32
    %15 = tpu.dynamic_rotate %14 by %c17_i32 dim 1 : vector<8x256xf32>, i32 -> vector<8x256xf32>
    %16 = vector.broadcast %1 : vector<1x256xf32> to vector<8x256xf32>
    %17 = arith.mulf %15, %16 : vector<8x256xf32>
    %c16_i32 = arith.constant 16 : i32
    %18 = tpu.dynamic_rotate %14 by %c16_i32 dim 1 : vector<8x256xf32>, i32 -> vector<8x256xf32>
    %19 = vector.broadcast %2 : vector<1x256xf32> to vector<8x256xf32>
    %20 = arith.mulf %18, %19 : vector<8x256xf32>
    %c15_i32 = arith.constant 15 : i32
    %21 = tpu.dynamic_rotate %14 by %c15_i32 dim 1 : vector<8x256xf32>, i32 -> vector<8x256xf32>
    %22 = vector.broadcast %3 : vector<1x256xf32> to vector<8x256xf32>
    %23 = arith.mulf %21, %22 : vector<8x256xf32>
    %c1_i32 = arith.constant 1 : i32
    %24 = tpu.dynamic_rotate %14 by %c1_i32 dim 1 : vector<8x256xf32>, i32 -> vector<8x256xf32>
    %25 = vector.broadcast %4 : vector<1x256xf32> to vector<8x256xf32>
    %26 = arith.mulf %24, %25 : vector<8x256xf32>
    %c255_i32 = arith.constant 255 : i32
    %27 = tpu.dynamic_rotate %14 by %c255_i32 dim 1 : vector<8x256xf32>, i32 -> vector<8x256xf32>
    %28 = vector.broadcast %5 : vector<1x256xf32> to vector<8x256xf32>
    %29 = arith.mulf %27, %28 : vector<8x256xf32>
    %c241_i32 = arith.constant 241 : i32
    %30 = tpu.dynamic_rotate %14 by %c241_i32 dim 1 : vector<8x256xf32>, i32 -> vector<8x256xf32>
    %31 = vector.broadcast %6 : vector<1x256xf32> to vector<8x256xf32>
    %32 = arith.mulf %30, %31 : vector<8x256xf32>
    %c240_i32 = arith.constant 240 : i32
    %33 = tpu.dynamic_rotate %14 by %c240_i32 dim 1 : vector<8x256xf32>, i32 -> vector<8x256xf32>
    %34 = vector.broadcast %7 : vector<1x256xf32> to vector<8x256xf32>
    %35 = arith.mulf %33, %34 : vector<8x256xf32>
    %c239_i32 = arith.constant 239 : i32
    %36 = tpu.dynamic_rotate %14 by %c239_i32 dim 1 : vector<8x256xf32>, i32 -> vector<8x256xf32>
    %37 = vector.broadcast %8 : vector<1x256xf32> to vector<8x256xf32>
    %38 = arith.mulf %36, %37 : vector<8x256xf32>
    %39 = tpu.concatenate %17, %20, %23, %26, %14, %29, %32, %35, %38 in 0 : vector<8x256xf32>, vector<8x256xf32>, vector<8x256xf32>, vector<8x256xf32>, vector<8x256xf32>, vector<8x256xf32>, vector<8x256xf32>, vector<8x256xf32>, vector<8x256xf32> -> vector<72x256xf32>
    %cst = arith.constant dense<0.000000e+00> : vector<8x256xf32>
    %40 = tpu.matmul %9, %39, %cst {dimension_numbers = #tpu.dot_dimension_numbers<[1], [0], [0], [1], [0, 0, 1, 1], [], []>} : vector<8x72xf32>, vector<72x256xf32>, vector<8x256xf32> -> vector<8x256xf32>
    %41 = vector.broadcast %11 : vector<8x1xf32> to vector<8x256xf32>
    %42 = arith.addf %40, %41 : vector<8x256xf32>
    %cst_12 = arith.constant 0.000000e+00 : f32
    %43 = vector.broadcast %cst_12 : f32 to vector<8x256xf32>
    %44 = arith.maximumf %42, %43 : vector<8x256xf32>
    %c17_i32_13 = arith.constant 17 : i32
    %45 = tpu.dynamic_rotate %44 by %c17_i32_13 dim 1 : vector<8x256xf32>, i32 -> vector<8x256xf32>
    %46 = vector.broadcast %1 : vector<1x256xf32> to vector<8x256xf32>
    %47 = arith.mulf %45, %46 : vector<8x256xf32>
    %c16_i32_14 = arith.constant 16 : i32
    %48 = tpu.dynamic_rotate %44 by %c16_i32_14 dim 1 : vector<8x256xf32>, i32 -> vector<8x256xf32>
    %49 = vector.broadcast %2 : vector<1x256xf32> to vector<8x256xf32>
    %50 = arith.mulf %48, %49 : vector<8x256xf32>
    %c15_i32_15 = arith.constant 15 : i32
    %51 = tpu.dynamic_rotate %44 by %c15_i32_15 dim 1 : vector<8x256xf32>, i32 -> vector<8x256xf32>
    %52 = vector.broadcast %3 : vector<1x256xf32> to vector<8x256xf32>
    %53 = arith.mulf %51, %52 : vector<8x256xf32>
    %c1_i32_16 = arith.constant 1 : i32
    %54 = tpu.dynamic_rotate %44 by %c1_i32_16 dim 1 : vector<8x256xf32>, i32 -> vector<8x256xf32>
    %55 = vector.broadcast %4 : vector<1x256xf32> to vector<8x256xf32>
    %56 = arith.mulf %54, %55 : vector<8x256xf32>
    %c255_i32_17 = arith.constant 255 : i32
    %57 = tpu.dynamic_rotate %44 by %c255_i32_17 dim 1 : vector<8x256xf32>, i32 -> vector<8x256xf32>
    %58 = vector.broadcast %5 : vector<1x256xf32> to vector<8x256xf32>
    %59 = arith.mulf %57, %58 : vector<8x256xf32>
    %c241_i32_18 = arith.constant 241 : i32
    %60 = tpu.dynamic_rotate %44 by %c241_i32_18 dim 1 : vector<8x256xf32>, i32 -> vector<8x256xf32>
    %61 = vector.broadcast %6 : vector<1x256xf32> to vector<8x256xf32>
    %62 = arith.mulf %60, %61 : vector<8x256xf32>
    %c240_i32_19 = arith.constant 240 : i32
    %63 = tpu.dynamic_rotate %44 by %c240_i32_19 dim 1 : vector<8x256xf32>, i32 -> vector<8x256xf32>
    %64 = vector.broadcast %7 : vector<1x256xf32> to vector<8x256xf32>
    %65 = arith.mulf %63, %64 : vector<8x256xf32>
    %c239_i32_20 = arith.constant 239 : i32
    %66 = tpu.dynamic_rotate %44 by %c239_i32_20 dim 1 : vector<8x256xf32>, i32 -> vector<8x256xf32>
    %67 = vector.broadcast %8 : vector<1x256xf32> to vector<8x256xf32>
    %68 = arith.mulf %66, %67 : vector<8x256xf32>
    %69 = tpu.concatenate %47, %50, %53, %56, %44, %59, %62, %65, %68 in 0 : vector<8x256xf32>, vector<8x256xf32>, vector<8x256xf32>, vector<8x256xf32>, vector<8x256xf32>, vector<8x256xf32>, vector<8x256xf32>, vector<8x256xf32>, vector<8x256xf32> -> vector<72x256xf32>
    %cst_21 = arith.constant dense<0.000000e+00> : vector<8x256xf32>
    %70 = tpu.matmul %10, %69, %cst_21 {dimension_numbers = #tpu.dot_dimension_numbers<[1], [0], [0], [1], [0, 0, 1, 1], [], []>} : vector<8x72xf32>, vector<72x256xf32>, vector<8x256xf32> -> vector<8x256xf32>
    %71 = vector.broadcast %12 : vector<8x1xf32> to vector<8x256xf32>
    %72 = arith.addf %70, %71 : vector<8x256xf32>
    %73 = arith.addf %72, %14 : vector<8x256xf32>
    %cst_22 = arith.constant 0.000000e+00 : f32
    %74 = vector.broadcast %cst_22 : f32 to vector<8x256xf32>
    %75 = arith.maximumf %73, %74 : vector<8x256xf32>
    %c0_23 = arith.constant 0 : index
    %c0_24 = arith.constant 0 : index
    %c0_25 = arith.constant 0 : index
    %76 = vector.load %arg7[%c0_23, %c0_24, %c0_25] : memref<1x8x256xf32, #tpu.memory_space<vmem>>, vector<1x8x256xf32>
    %77 = vector.shape_cast %76 : vector<1x8x256xf32> to vector<8x256xf32>
    %78 = vector.shape_cast %75 : vector<8x256xf32> to vector<1x8x256xf32>
    tpu.vector_store %arg7[%c0_23, %c0_24, %c0_25], %78 {strides = array<i32>} : memref<1x8x256xf32, #tpu.memory_space<vmem>>, vector<1x8x256xf32>,
    return
  }
  func.func @transform_0(%arg0: i32) -> (i32, i32, i32) {
    %c0_i32 = arith.constant 0 : i32
    %c0_i32_0 = arith.constant 0 : i32
    %c0_i32_1 = arith.constant 0 : i32
    return %arg0, %c0_i32, %c0_i32_0 : i32, i32, i32
  }
  func.func @transform_1(%arg0: i32) -> (i32, i32) {
    %c0_i32 = arith.constant 0 : i32
    %c0_i32_0 = arith.constant 0 : i32
    %c0_i32_1 = arith.constant 0 : i32
    return %c0_i32, %c0_i32_0 : i32, i32
  }
  func.func @transform_2(%arg0: i32) -> (i32, i32) {
    %c0_i32 = arith.constant 0 : i32
    %c0_i32_0 = arith.constant 0 : i32
    %c0_i32_1 = arith.constant 0 : i32
    return %c0_i32, %c0_i32_0 : i32, i32
  }
  func.func @transform_3(%arg0: i32) -> (i32, i32) {
    %c0_i32 = arith.constant 0 : i32
    %c0_i32_0 = arith.constant 0 : i32
    %c0_i32_1 = arith.constant 0 : i32
    return %c0_i32, %c0_i32_0 : i32, i32
  }
  func.func @transform_4(%arg0: i32) -> (i32, i32) {
    %c0_i32 = arith.constant 0 : i32
    %c0_i32_0 = arith.constant 0 : i32
    %c0_i32_1 = arith.constant 0 : i32
    return %c0_i32, %c0_i32_0 : i32, i32
  }
  func.func @transform_5(%arg0: i32) -> (i32, i32) {
    %c0_i32 = arith.constant 0 : i32
    %c0_i32_0 = arith.constant 0 : i32
    %c0_i32_1 = arith.constant 0 : i32
    return %c0_i32, %c0_i32_0 : i32, i32
  }
  func.func @transform_6(%arg0: i32) -> (i32, i32, i32) {
    %c0_i32 = arith.constant 0 : i32
    %c0_i32_0 = arith.constant 0 : i32
    %c0_i32_1 = arith.constant 0 : i32
    return %arg0, %c0_i32, %c0_i32_0 : i32, i32, i32
  }
}

</mosaic_0001>

<llo_original>
// kernel: tpu_custom_call.1
$region0: #{tpu_custom_call.1}
  #allocation0 [shape = 'u32[]', space=smem, size = 0x4, offset = 0x4, fixed_abs, tag = 'smem constant byte address 0x4 - core index']
  #allocation1 [shape = 'u32[72,128]{1,0:T(1,128)}', space=vmem, size = 0x9000, scoped, tag = 'internal scratch']
  %s0 = inlined_call_operand.hbm [shape: f32[2,8,256], index: 0, kind: input, shape index: {}]
  %s1 = inlined_call_operand.hbm [shape: f32[9,256], index: 1, kind: input, shape index: {}]
  %s2 = inlined_call_operand.vmem [shape: f32[8,72], index: 2, kind: input, shape index: {}]
  %s3 = inlined_call_operand.vmem [shape: f32[8,72], index: 3, kind: input, shape index: {}]
  %s4 = inlined_call_operand.vmem [shape: f32[8,1], index: 4, kind: input, shape index: {}]
  %s5 = inlined_call_operand.vmem [shape: f32[8,1], index: 5, kind: input, shape index: {}]
  %s6 = inlined_call_operand.hbm [shape: f32[2,8,256], index: 6, kind: output, shape index: {}]
  %s7 = sld [smem:[#allocation0]]
  $region65: #{tpu_custom_call.1} parent=0
    _
  %s9 = ssub.s32 1, %s7
  %s10 = scalar_select 0, %s9, %s7
  $region1: #{tpu_custom_call.1} parent=0
    #allocation2 [shape = 'u8[16384]{0}', space=vmem, size = 0x4000, scoped, tag = 'input window, operand 0']
    #allocation3 [shape = 's32[2]{0}', space=sflag, size = 0x8, scoped, tag = 'scoped memory for tpu_custom_call.1']
    #allocation4 [shape = 's32[2]{0}', space=sflag, size = 0x8, scoped, tag = 'scoped memory for tpu_custom_call.1']
    #allocation5 [shape = 'u8[16384]{0}', space=vmem, size = 0x4000, scoped, tag = 'input window, operand 1, single buffered']
    #allocation6 [shape = 's32[1]{0}', space=sflag, size = 0x4, scoped, tag = 'scoped memory for tpu_custom_call.1']
    #allocation7 [shape = 'u8[16384]{0}', space=vmem, size = 0x4000, scoped, tag = 'output window, operand 0']
    %11 = vsyncpa [#allocation3], 0
    %s12 = scalar_lea.sflag [#allocation3], 1
    %13 = vsyncpa %s12, 0
    %14 = vsyncpa [#allocation6], 0
    %15 = vsyncpa [#allocation4], 0
    %s16 = scalar_lea.sflag [#allocation4], 1
    %17 = vsyncpa %s16, 0
    loop: start=0, step=1, limit=4
    $region2: #{tpu_custom_call.1} parent=1 // loop_pre_header
      _
    $region3: #{tpu_custom_call.1} parent=1 // loop_header
      %s19 = sphi 0, %s23
      %p20 = scmp.ge.s32.totalorder %s19, 4
      %s29 = sphi 0, %s31
      %s32 = sphi 0, %s29
      %s33 = sphi 0, %s32
      %s49 = sphi 0, %s33
      %s53 = sphi 0, %s53
      %s55 = sphi 0, %s53
      %s56 = sphi 0, %s55
      %s70 = sphi 0, %s56
      %s74 = sphi 0, %s74
      %s76 = sphi 0, %s74
      %s77 = sphi 0, %s76
      %s91 = sphi 0, %s77
      %s95 = sphi 0, %s95
      %s97 = sphi 0, %s95
      %s98 = sphi 0, %s97
      %s112 = sphi 0, %s98
      %s116 = sphi 0, %s116
      %s118 = sphi 0, %s116
      %s119 = sphi 0, %s118
      %s133 = sphi 0, %s119
      %s137 = sphi 0, %s137
      %s139 = sphi 0, %s137
      %s140 = sphi 0, %s139
      %s154 = sphi 0, %s140
      %s160 = sphi 0, %s162
      %s163 = sphi 0, %s160
      %s164 = sphi 0, %s163
      %s180 = sphi 0, %s164
    $region4: #{tpu_custom_call.1} parent=1 // loop_header_branch
      %22 = sbr.rel (%p20) target = $region8
    $region5: #{tpu_custom_call.1} parent=1 // loop_body
      %s24 = ssub.s32 %s19, 1
      %s25 = ssub.s32 %s19, 2
      %s26 = sadd.s32 %s19, 1
      %s27 = ssub.s32 %s19, %s26
      %p28 = scmp.eq.s32.totalorder %s27, 0
      %s30 = sadd.s32 %s29, 1
      %s31 = scalar_select %p28, %s29, %s30
      %p34 = pneg %p28
      %p35 = scmp.eq.s32.totalorder %s19, 1
      %p36 = por %p34, %p35
      %p37 = scmp.ne.s32.totalorder %s29, %s32
      %p38 = scmp.eq.s32.totalorder %s19, 0
      %p39 = por %p37, %p38
      %p40 = scmp.ne.s32.totalorder %s29, %s32
      %p41 = scmp.eq.s32.totalorder %s24, 1
      %p42 = por %p40, %p41
      %p43 = scmp.ne.s32.totalorder %s32, %s33
      %p44 = scmp.eq.s32.totalorder %s24, 0
      %p45 = por %p43, %p44
      %p46 = scmp.ne.s32.totalorder %s32, %s33
      %p47 = scmp.eq.s32.totalorder %s25, 1
      %p48 = por %p46, %p47
      %p50 = scmp.ne.s32.totalorder %s33, %s49
      %p51 = scmp.eq.s32.totalorder %s25, 0
      %p52 = por %p50, %p51
      %s54 = sadd.s32 %s53, 1
      %p57 = scmp.eq.s32.totalorder %s19, 1
      %p58 = scmp.ne.s32.totalorder %s53, %s55
      %p59 = scmp.eq.s32.totalorder %s19, 0
      %p60 = por %p58, %p59
      %p61 = scmp.ne.s32.totalorder %s53, %s55
      %p62 = scmp.eq.s32.totalorder %s24, 1
      %p63 = por %p61, %p62
      %p64 = scmp.ne.s32.totalorder %s55, %s56
      %p65 = scmp.eq.s32.totalorder %s24, 0
      %p66 = por %p64, %p65
      %p67 = scmp.ne.s32.totalorder %s55, %s56
      %p68 = scmp.eq.s32.totalorder %s25, 1
      %p69 = por %p67, %p68
      %p71 = scmp.ne.s32.totalorder %s56, %s70
      %p72 = scmp.eq.s32.totalorder %s25, 0
      %p73 = por %p71, %p72
      %s75 = sadd.s32 %s74, 1
      %p78 = scmp.eq.s32.totalorder %s19, 1
      %p79 = scmp.ne.s32.totalorder %s74, %s76
      %p80 = scmp.eq.s32.totalorder %s19, 0
      %p81 = por %p79, %p80
      %p82 = scmp.ne.s32.totalorder %s74, %s76
      %p83 = scmp.eq.s32.totalorder %s24, 1
      %p84 = por %p82, %p83
      %p85 = scmp.ne.s32.totalorder %s76, %s77
      %p86 = scmp.eq.s32.totalorder %s24, 0
      %p87 = por %p85, %p86
      %p88 = scmp.ne.s32.totalorder %s76, %s77
      %p89 = scmp.eq.s32.totalorder %s25, 1
      %p90 = por %p88, %p89
      %p92 = scmp.ne.s32.totalorder %s77, %s91
      %p93 = scmp.eq.s32.totalorder %s25, 0
      %p94 = por %p92, %p93
      %s96 = sadd.s32 %s95, 1
      %p99 = scmp.eq.s32.totalorder %s19, 1
      %p100 = scmp.ne.s32.totalorder %s95, %s97
      %p101 = scmp.eq.s32.totalorder %s19, 0
      %p102 = por %p100, %p101
      %p103 = scmp.ne.s32.totalorder %s95, %s97
      %p104 = scmp.eq.s32.totalorder %s24, 1
      %p105 = por %p103, %p104
      %p106 = scmp.ne.s32.totalorder %s97, %s98
      %p107 = scmp.eq.s32.totalorder %s24, 0
      %p108 = por %p106, %p107
      %p109 = scmp.ne.s32.totalorder %s97, %s98
      %p110 = scmp.eq.s32.totalorder %s25, 1
      %p111 = por %p109, %p110
      %p113 = scmp.ne.s32.totalorder %s98, %s112
      %p114 = scmp.eq.s32.totalorder %s25, 0
      %p115 = por %p113, %p114
      %s117 = sadd.s32 %s116, 1
      %p120 = scmp.eq.s32.totalorder %s19, 1
      %p121 = scmp.ne.s32.totalorder %s116, %s118
      %p122 = scmp.eq.s32.totalorder %s19, 0
      %p123 = por %p121, %p122
      %p124 = scmp.ne.s32.totalorder %s116, %s118
      %p125 = scmp.eq.s32.totalorder %s24, 1
      %p126 = por %p124, %p125
      %p127 = scmp.ne.s32.totalorder %s118, %s119
      %p128 = scmp.eq.s32.totalorder %s24, 0
      %p129 = por %p127, %p128
      %p130 = scmp.ne.s32.totalorder %s118, %s119
      %p131 = scmp.eq.s32.totalorder %s25, 1
      %p132 = por %p130, %p131
      %p134 = scmp.ne.s32.totalorder %s119, %s133
      %p135 = scmp.eq.s32.totalorder %s25, 0
      %p136 = por %p134, %p135
      %s138 = sadd.s32 %s137, 1
      %p141 = scmp.eq.s32.totalorder %s19, 1
      %p142 = scmp.ne.s32.totalorder %s137, %s139
      %p143 = scmp.eq.s32.totalorder %s19, 0
      %p144 = por %p142, %p143
      %p145 = scmp.ne.s32.totalorder %s137, %s139
      %p146 = scmp.eq.s32.totalorder %s24, 1
      %p147 = por %p145, %p146
      %p148 = scmp.ne.s32.totalorder %s139, %s140
      %p149 = scmp.eq.s32.totalorder %s24, 0
      %p150 = por %p148, %p149
      %p151 = scmp.ne.s32.totalorder %s139, %s140
      %p152 = scmp.eq.s32.totalorder %s25, 1
      %p153 = por %p151, %p152
      %p155 = scmp.ne.s32.totalorder %s140, %s154
      %p156 = scmp.eq.s32.totalorder %s25, 0
      %p157 = por %p155, %p156
      %s158 = ssub.s32 %s19, %s26
      %p159 = scmp.eq.s32.totalorder %s158, 0
      %s161 = sadd.s32 %s160, 1
      %s162 = scalar_select %p159, %s160, %s161
      %p165 = pneg %p159
      %p166 = scmp.eq.s32.totalorder %s19, 1
      %p167 = por %p165, %p166
      %p168 = scmp.ne.s32.totalorder %s160, %s163
      %p169 = scmp.eq.s32.totalorder %s19, 0
      %p170 = por %p168, %p169
      %p171 = scmp.ne.s32.totalorder %s160, %s163
      %p172 = scmp.eq.s32.totalorder %s24, 1
      %p173 = por %p171, %p172
      %p174 = scmp.ne.s32.totalorder %s163, %s164
      %p175 = scmp.eq.s32.totalorder %s24, 0
      %p176 = por %p174, %p175
      %p177 = scmp.ne.s32.totalorder %s163, %s164
      %p178 = scmp.eq.s32.totalorder %s25, 1
      %p179 = por %p177, %p178
      %p181 = scmp.ne.s32.totalorder %s164, %s180
      %p182 = scmp.eq.s32.totalorder %s25, 0
      %p183 = por %p181, %p182
      %p184 = scmp.le.s32.totalorder 1, %s19
      %p185 = scmp.lt.s32.totalorder %s19, 3
      %p186 = pnand %p184, %p185
      %p187 = pneg %p186
      // Predicated region
      $region9: #{tpu_custom_call.1} parent=5 // pred_check
        _
      $region10: #{tpu_custom_call.1} parent=5 // pred_check_branch
        %189 = sbr.rel (%p186) target = $region12
      $region11: #{tpu_custom_call.1} parent=5 // pred_region
        %s190 = ssub.s32 %s19, 1
        // Predicated region
        $region13: #{tpu_custom_call.1} parent=11 // pred_check
          %p191 = pneg %p66
        $region14: #{tpu_custom_call.1} parent=11 // pred_check_branch
          %193 = sbr.rel (%p191) target = $region16
        $region15: #{tpu_custom_call.1} parent=11 // pred_region
          %195 = vsyncadd [#allocation6], 0
          %s196 = sshll.u32 %s1, 4
          %s197 = int_to_ptr.hbm [resolvable:$true] %s196
          %s198 = sshll.u32 [#allocation5], 4
          %s199 = int_to_ptr.vmem [resolvable:$true] %s198
          %204 = dma.hbm_to_vmem [thread:$0]  %s197, 512, %s199, [#allocation6], 256, 256, 16
        $region16: #{tpu_custom_call.1} parent=11 // pred_fallthru
          _
        // Predicated region
        $region17: #{tpu_custom_call.1} parent=11 // pred_check
          %p205 = pneg %p87
        $region18: #{tpu_custom_call.1} parent=11 // pred_check_branch
          %207 = sbr.rel (%p205) target = $region20
        $region19: #{tpu_custom_call.1} parent=11 // pred_region
          _
        $region20: #{tpu_custom_call.1} parent=11 // pred_fallthru
          _
        // Predicated region
        $region21: #{tpu_custom_call.1} parent=11 // pred_check
          %p208 = pneg %p108
        $region22: #{tpu_custom_call.1} parent=11 // pred_check_branch
          %210 = sbr.rel (%p208) target = $region24
        $region23: #{tpu_custom_call.1} parent=11 // pred_region
          _
        $region24: #{tpu_custom_call.1} parent=11 // pred_fallthru
          _
        // Predicated region
        $region25: #{tpu_custom_call.1} parent=11 // pred_check
          %p211 = pneg %p129
        $region26: #{tpu_custom_call.1} parent=11 // pred_check_branch
          %213 = sbr.rel (%p211) target = $region28
        $region27: #{tpu_custom_call.1} parent=11 // pred_region
          _
        $region28: #{tpu_custom_call.1} parent=11 // pred_fallthru
          _
        // Predicated region
        $region29: #{tpu_custom_call.1} parent=11 // pred_check
          %p214 = pneg %p150
        $region30: #{tpu_custom_call.1} parent=11 // pred_check_branch
          %216 = sbr.rel (%p214) target = $region32
        $region31: #{tpu_custom_call.1} parent=11 // pred_region
          _
        $region32: #{tpu_custom_call.1} parent=11 // pred_fallthru
          _
      $region12: #{tpu_custom_call.1} parent=5 // pred_fallthru
        _
      %p217 = scmp.lt.s32.totalorder %s19, 2
      // Predicated region
      $region33: #{tpu_custom_call.1} parent=5 // pred_check
        %p218 = pneg %p217
      $region34: #{tpu_custom_call.1} parent=5 // pred_check_branch
        %220 = sbr.rel (%p218) target = $region36
      $region35: #{tpu_custom_call.1} parent=5 // pred_region
        // Predicated region
        $region37: #{tpu_custom_call.1} parent=35 // pred_check
          %p221 = pneg %p39
        $region38: #{tpu_custom_call.1} parent=35 // pred_check_branch
          %223 = sbr.rel (%p221) target = $region40
        $region39: #{tpu_custom_call.1} parent=35 // pred_region
          %s224 = sand.u32 %s29, 1
          %s225 = scalar_lea.sflag [#allocation3], %s224
          %s226 = sand.u32 %s29, 1
          %s227 = smul.addr %s226, 16
          %s228 = scalar_lea.vmem [#allocation2], %s227
          %230 = vsyncadd %s225, 0
          %s231 = smul.addr %s19, 2
          %s232 = smul.addr %s231, 8
          %s233 = scalar_lea.hbm %s0, %s232
          %s235 = sshll.u32 %s233, 4
          %s236 = int_to_ptr.hbm [resolvable:$true] %s235
          %s237 = sshll.u32 %s228, 4
          %s238 = int_to_ptr.vmem [resolvable:$true] %s237
          %240 = dma.hbm_to_vmem [thread:$0]  %s236, 256, %s238, %s225
        $region40: #{tpu_custom_call.1} parent=35 // pred_fallthru
          _
      $region36: #{tpu_custom_call.1} parent=5 // pred_fallthru
        _
      %p241 = scmp.le.s32.totalorder 1, %s19
      %p242 = scmp.lt.s32.totalorder %s19, 3
      %p243 = pnand %p241, %p242
      %p244 = pneg %p243
      // Predicated region
      $region41: #{tpu_custom_call.1} parent=5 // pred_check
        _
      $region42: #{tpu_custom_call.1} parent=5 // pred_check_branch
        %246 = sbr.rel (%p243) target = $region44
      $region43: #{tpu_custom_call.1} parent=5 // pred_region
        %s247 = ssub.s32 %s19, 1
        %s248 = sand.u32 %s32, 1
        %s249 = scalar_lea.sflag [#allocation3], %s248
        %s250 = sand.u32 %s32, 1
        %s251 = smul.addr %s250, 16
        %s252 = scalar_lea.vmem [#allocation2], %s251
        // Predicated region
        $region45: #{tpu_custom_call.1} parent=43 // pred_check
          %p253 = pneg %p45
        $region46: #{tpu_custom_call.1} parent=43 // pred_check_branch
          %255 = sbr.rel (%p253) target = $region48
        $region47: #{tpu_custom_call.1} parent=43 // pred_region
          %257 = dma.done %s249, 256
        $region48: #{tpu_custom_call.1} parent=43 // pred_fallthru
          _
        // Predicated region
        $region49: #{tpu_custom_call.1} parent=43 // pred_check
          %p258 = pneg %p66
        $region50: #{tpu_custom_call.1} parent=43 // pred_check_branch
          %260 = sbr.rel (%p258) target = $region52
        $region51: #{tpu_custom_call.1} parent=43 // pred_region
          %262 = dma.done [#allocation6], 512
        $region52: #{tpu_custom_call.1} parent=43 // pred_fallthru
          _
        %s263 = sand.u32 %s32, 1
        %s264 = scalar_lea.sflag [#allocation3], %s263
        %s265 = sand.u32 %s32, 1
        %s266 = smul.addr %s265, 16
        %s267 = scalar_lea.vmem [#allocation2], %s266
        %p268 = pneg %p45
        %p269 = pneg %p42
        %p270 = pneg %p66
        %p271 = pneg %p63
        %p272 = pneg %p87
        %p273 = pneg %p84
        %p274 = pneg %p108
        %p275 = pneg %p105
        %p276 = pneg %p129
        %p277 = pneg %p126
        %p278 = pneg %p150
        %p279 = pneg %p147
        %p280 = pneg %p176
        %p281 = pneg %p173
        %s282 = sand.u32 %s163, 1
        %s283 = scalar_lea.sflag [#allocation4], %s282
        %s284 = sand.u32 %s163, 1
        %s285 = smul.addr %s284, 16
        %s286 = scalar_lea.vmem [#allocation7], %s285
        %v287 = vld [vmem:[#allocation5] sm:$0xff]
        %v288 = vld [vmem:[#allocation5 + $0x8] sm:$0xff]
        %v289 = vld [vmem:[#allocation5 + $0x10] sm:$0x1]
        %v290 = vld [vmem:[#allocation5 + $0x18] sm:$0x1]
        %v291 = vld [vmem:[%s2] sm:$0xff]
        %v292 = vld [vmem:[%s3] sm:$0xff]
        %v293 = vld [vmem:[%s4] sm:$0xff]
        %v294 = vld [vmem:[%s5] sm:$0xff]
        %v295 = vld [vmem:[%s252] sm:$0xff]
        %v296 = vld [vmem:[%s252 + $0x8] sm:$0xff]
        %297 = vrot.lane.b32.xlu0 %v295, 17
        %v298 = vpop.permute.xlu0 %297
        %299 = vrot.lane.b32.xlu0 %v296, 17
        %v300 = vpop.permute.xlu0 %299
        %v301 = vlaneseq
        %v302 = vand.u32 %v301, 127
        %vm303 = vcmp.lt.s32.totalorder %v302, 17
        %v304 = vsel %vm303, %v298, %v300
        %v305 = vsel %vm303, %v300, %v298
        %v306 = vperm.slane %v287, 0
        %v307 = vperm.slane %v288, 0
        %v308 = vmul.f32 %v305, %v306
        %v309 = vmul.f32 %v304, %v307
        %310 = vrot.lane.b32.xlu0 %v295, 16
        %v311 = vpop.permute.xlu0 %310
        %312 = vrot.lane.b32.xlu0 %v296, 16
        %v313 = vpop.permute.xlu0 %312
        %vm314 = vcmp.lt.s32.totalorder %v302, 16
        %v315 = vsel %vm314, %v311, %v313
        %v316 = vsel %vm314, %v313, %v311
        %v317 = vperm.slane %v287, 1
        %v318 = vperm.slane %v288, 1
        %v319 = vmul.f32 %v316, %v317
        %v320 = vmul.f32 %v315, %v318
        %321 = vrot.lane.b32.xlu0 %v295, 15
        %v322 = vpop.permute.xlu0 %321
        %323 = vrot.lane.b32.xlu0 %v296, 15
        %v324 = vpop.permute.xlu0 %323
        %vm325 = vcmp.lt.s32.totalorder %v302, 15
        %v326 = vsel %vm325, %v322, %v324
        %v327 = vsel %vm325, %v324, %v322
        %v328 = vperm.slane %v287, 2
        %v329 = vperm.slane %v288, 2
        %v330 = vmul.f32 %v327, %v328
        %v331 = vmul.f32 %v326, %v329
        %332 = vrot.lane.b32.xlu0 %v295, 1
        %v333 = vpop.permute.xlu0 %332
        %334 = vrot.lane.b32.xlu0 %v296, 1
        %v335 = vpop.permute.xlu0 %334
        %vm336 = vcmp.lt.s32.totalorder %v302, 1
        %v337 = vsel %vm336, %v333, %v335
        %v338 = vsel %vm336, %v335, %v333
        %v339 = vperm.slane %v287, 3
        %v340 = vperm.slane %v288, 3
        %v341 = vmul.f32 %v338, %v339
        %v342 = vmul.f32 %v337, %v340
        %343 = vrot.lane.b32.xlu0 %v295, 127
        %v344 = vpop.permute.xlu0 %343
        %345 = vrot.lane.b32.xlu0 %v296, 127
        %v346 = vpop.permute.xlu0 %345
        %vm347 = vcmp.lt.s32.totalorder %v302, 127
        %v348 = vsel %vm347, %v344, %v346
        %v349 = vsel %vm347, %v346, %v344
        %v350 = vperm.slane %v287, 5
        %v351 = vperm.slane %v288, 5
        %v352 = vmul.f32 %v348, %v350
        %v353 = vmul.f32 %v349, %v351
        %354 = vrot.lane.b32.xlu0 %v295, 113
        %v355 = vpop.permute.xlu0 %354
        %356 = vrot.lane.b32.xlu0 %v296, 113
        %v357 = vpop.permute.xlu0 %356
        %vm358 = vcmp.lt.s32.totalorder %v302, 113
        %v359 = vsel %vm358, %v355, %v357
        %v360 = vsel %vm358, %v357, %v355
        %v361 = vperm.slane %v287, 6
        %v362 = vperm.slane %v288, 6
        %v363 = vmul.f32 %v359, %v361
        %v364 = vmul.f32 %v360, %v362
        %365 = vrot.lane.b32.xlu0 %v295, 112
        %v366 = vpop.permute.xlu0 %365
        %367 = vrot.lane.b32.xlu0 %v296, 112
        %v368 = vpop.permute.xlu0 %367
        %vm369 = vcmp.lt.s32.totalorder %v302, 112
        %v370 = vsel %vm369, %v366, %v368
        %v371 = vsel %vm369, %v368, %v366
        %v372 = vperm.slane %v287, 7
        %v373 = vperm.slane %v288, 7
        %v374 = vmul.f32 %v370, %v372
        %v375 = vmul.f32 %v371, %v373
        %376 = vrot.lane.b32.xlu0 %v295, 111
        %v377 = vpop.permute.xlu0 %376
        %378 = vrot.lane.b32.xlu0 %v296, 111
        %v379 = vpop.permute.xlu0 %378
        %vm380 = vcmp.lt.s32.totalorder %v302, 111
        %v381 = vsel %vm380, %v377, %v379
        %v382 = vsel %vm380, %v379, %v377
        %v383 = vperm.slane %v289, 0
        %v384 = vperm.slane %v290, 0
        %v385 = vmul.f32 %v381, %v383
        %v386 = vmul.f32 %v382, %v384
        %388 = vset.pattern.permute.xlu0 0
        %389 = vperm.xlu0 %388, %v293
        %v390 = vpop.permute.xlu0 %389
        %vm392 = vcmask 588800
        %v394 = vsel %vm392, %v291, 0
        %396 = vmatpush.msra.mxu0 0.0
        %397 = vmatpush.msra.mxu0 0.0
        %398 = vmatpush.msra.mxu0 0.0
        %399 = vmatpush.msra.mxu0 0.0
        %400 = vmatpush.msra.mxu0 0.0
        %401 = vmatpush.msra.mxu0 0.0
        %402 = vmatpush.msra.mxu0 0.0
        %403 = vmatpush.msra.mxu0 %v385
        %404 = vmatpush.msra.mxu0 %v374
        %405 = vmatpush.msra.mxu0 %v363
        %406 = vmatpush.msra.mxu0 %v352
        %407 = vmatpush.msra.mxu0 %v295
        %408 = vmatpush.msra.mxu0 %v341
        %409 = vmatpush.msra.mxu0 %v330
        %410 = vmatpush.msra.mxu0 %v319
        %411 = vmatpush.msra.mxu0 %v308
        %412 = vmatmul.f32.gmra.mxu0 %v394
        %v413 = vpop.f32.mrf.mxu0
        %v414 = vadd.f32 %v390, %v413
        %415 = vdwg.mxu0
        %416 = vmatpush.msra.mxu0 0.0
        %417 = vmatpush.msra.mxu0 0.0
        %418 = vmatpush.msra.mxu0 0.0
        %419 = vmatpush.msra.mxu0 0.0
        %420 = vmatpush.msra.mxu0 0.0
        %421 = vmatpush.msra.mxu0 0.0
        %422 = vmatpush.msra.mxu0 0.0
        %423 = vmatpush.msra.mxu0 %v386
        %424 = vmatpush.msra.mxu0 %v375
        %425 = vmatpush.msra.mxu0 %v364
        %426 = vmatpush.msra.mxu0 %v353
        %427 = vmatpush.msra.mxu0 %v296
        %428 = vmatpush.msra.mxu0 %v342
        %429 = vmatpush.msra.mxu0 %v331
        %430 = vmatpush.msra.mxu0 %v320
        %431 = vmatpush.msra.mxu0 %v309
        %432 = vmatmul.f32.gmra.mxu0 %v394
        %v433 = vpop.f32.mrf.mxu0
        %v434 = vadd.f32 %v390, %v433
        %435 = vdwg.mxu0
        %v436 = vmax.f32 %v414, 0.0
        %v437 = vmax.f32 %v434, 0.0
        %438 = vrot.lane.b32.xlu0 %v436, 17
        %v439 = vpop.permute.xlu0 %438
        %440 = vrot.lane.b32.xlu0 %v437, 17
        %v441 = vpop.permute.xlu0 %440
        %v442 = vsel %vm303, %v439, %v441
        %v443 = vsel %vm303, %v441, %v439
        %v444 = vmul.f32 %v443, %v306
        %v445 = vmul.f32 %v442, %v307
        %446 = vrot.lane.b32.xlu0 %v436, 16
        %v447 = vpop.permute.xlu0 %446
        %448 = vrot.lane.b32.xlu0 %v437, 16
        %v449 = vpop.permute.xlu0 %448
        %v450 = vsel %vm314, %v447, %v449
        %v451 = vsel %vm314, %v449, %v447
        %v452 = vmul.f32 %v451, %v317
        %v453 = vmul.f32 %v450, %v318
        %454 = vrot.lane.b32.xlu0 %v436, 15
        %v455 = vpop.permute.xlu0 %454
        %456 = vrot.lane.b32.xlu0 %v437, 15
        %v457 = vpop.permute.xlu0 %456
        %v458 = vsel %vm325, %v455, %v457
        %v459 = vsel %vm325, %v457, %v455
        %v460 = vmul.f32 %v459, %v328
        %v461 = vmul.f32 %v458, %v329
        %462 = vrot.lane.b32.xlu0 %v436, 1
        %v463 = vpop.permute.xlu0 %462
        %464 = vrot.lane.b32.xlu0 %v437, 1
        %v465 = vpop.permute.xlu0 %464
        %v466 = vsel %vm336, %v463, %v465
        %v467 = vsel %vm336, %v465, %v463
        %v468 = vmul.f32 %v467, %v339
        %v469 = vmul.f32 %v466, %v340
        %470 = vrot.lane.b32.xlu0 %v436, 127
        %v471 = vpop.permute.xlu0 %470
        %472 = vrot.lane.b32.xlu0 %v437, 127
        %v473 = vpop.permute.xlu0 %472
        %v474 = vsel %vm347, %v471, %v473
        %v475 = vsel %vm347, %v473, %v471
        %v476 = vmul.f32 %v474, %v350
        %v477 = vmul.f32 %v475, %v351
        %478 = vrot.lane.b32.xlu0 %v436, 113
        %v479 = vpop.permute.xlu0 %478
        %480 = vrot.lane.b32.xlu0 %v437, 113
        %v481 = vpop.permute.xlu0 %480
        %v482 = vsel %vm358, %v479, %v481
        %v483 = vsel %vm358, %v481, %v479
        %v484 = vmul.f32 %v482, %v361
        %v485 = vmul.f32 %v483, %v362
        %486 = vrot.lane.b32.xlu0 %v436, 112
        %v487 = vpop.permute.xlu0 %486
        %488 = vrot.lane.b32.xlu0 %v437, 112
        %v489 = vpop.permute.xlu0 %488
        %v490 = vsel %vm369, %v487, %v489
        %v491 = vsel %vm369, %v489, %v487
        %v492 = vmul.f32 %v490, %v372
        %v493 = vmul.f32 %v491, %v373
        %494 = vrot.lane.b32.xlu0 %v436, 111
        %v495 = vpop.permute.xlu0 %494
        %496 = vrot.lane.b32.xlu0 %v437, 111
        %v497 = vpop.permute.xlu0 %496
        %v498 = vsel %vm380, %v495, %v497
        %v499 = vsel %vm380, %v497, %v495
        %v500 = vmul.f32 %v498, %v383
        %v501 = vmul.f32 %v499, %v384
        %503 = vset.pattern.permute.xlu0 0
        %504 = vperm.xlu0 %503, %v294
        %v505 = vpop.permute.xlu0 %504
        %v508 = vsel %vm392, %v292, 0
        %510 = vmatpush.msra.mxu0 0.0
        %511 = vmatpush.msra.mxu0 0.0
        %512 = vmatpush.msra.mxu0 0.0
        %513 = vmatpush.msra.mxu0 0.0
        %514 = vmatpush.msra.mxu0 0.0
        %515 = vmatpush.msra.mxu0 0.0
        %516 = vmatpush.msra.mxu0 0.0
        %517 = vmatpush.msra.mxu0 %v500
        %518 = vmatpush.msra.mxu0 %v492
        %519 = vmatpush.msra.mxu0 %v484
        %520 = vmatpush.msra.mxu0 %v476
        %521 = vmatpush.msra.mxu0 %v436
        %522 = vmatpush.msra.mxu0 %v468
        %523 = vmatpush.msra.mxu0 %v460
        %524 = vmatpush.msra.mxu0 %v452
        %525 = vmatpush.msra.mxu0 %v444
        %526 = vmatmul.f32.gmra.mxu0 %v508
        %v527 = vpop.f32.mrf.mxu0
        %v528 = vadd.f32 %v505, %v527
        %529 = vdwg.mxu0
        %530 = vmatpush.msra.mxu0 0.0
        %531 = vmatpush.msra.mxu0 0.0
        %532 = vmatpush.msra.mxu0 0.0
        %533 = vmatpush.msra.mxu0 0.0
        %534 = vmatpush.msra.mxu0 0.0
        %535 = vmatpush.msra.mxu0 0.0
        %536 = vmatpush.msra.mxu0 0.0
        %537 = vmatpush.msra.mxu0 %v501
        %538 = vmatpush.msra.mxu0 %v493
        %539 = vmatpush.msra.mxu0 %v485
        %540 = vmatpush.msra.mxu0 %v477
        %541 = vmatpush.msra.mxu0 %v437
        %542 = vmatpush.msra.mxu0 %v469
        %543 = vmatpush.msra.mxu0 %v461
        %544 = vmatpush.msra.mxu0 %v453
        %545 = vmatpush.msra.mxu0 %v445
        %546 = vmatmul.f32.gmra.mxu0 %v508
        %v547 = vpop.f32.mrf.mxu0
        %v548 = vadd.f32 %v505, %v547
        %549 = vdwg.mxu0
        %v550 = vadd.f32 %v528, %v295
        %v551 = vadd.f32 %v548, %v296
        %v552 = vmax.f32 %v550, 0.0
        %v553 = vmax.f32 %v551, 0.0
        %554 = vst [vmem:[%s286] sm:$0xff] %v552
        %555 = vst [vmem:[%s286 + $0x8] sm:$0xff] %v553
        %s556 = sand.u32 %s163, 1
        %s557 = scalar_lea.sflag [#allocation4], %s556
        %s558 = sand.u32 %s163, 1
        %s559 = smul.addr %s558, 16
        %s560 = scalar_lea.vmem [#allocation7], %s559
        // Predicated region
        $region53: #{tpu_custom_call.1} parent=43 // pred_check
          %p561 = pneg %p173
        $region54: #{tpu_custom_call.1} parent=43 // pred_check_branch
          %563 = sbr.rel (%p561) target = $region56
        $region55: #{tpu_custom_call.1} parent=43 // pred_region
          %565 = vsyncadd %s557, 0
          %s566 = smul.addr %s24, 2
          %s567 = smul.addr %s566, 8
          %s568 = scalar_lea.hbm %s6, %s567
          %s570 = sshll.u32 %s560, 4
          %s571 = int_to_ptr.vmem [resolvable:$true] %s570
          %s572 = sshll.u32 %s568, 4
          %s573 = int_to_ptr.hbm [resolvable:$true] %s572
          %575 = dma.vmem_to_hbm [thread:$0]  %s571, 256, %s573, %s557
        $region56: #{tpu_custom_call.1} parent=43 // pred_fallthru
          _
      $region44: #{tpu_custom_call.1} parent=5 // pred_fallthru
        _
      %p576 = scmp.le.s32.totalorder 2, %s19
      // Predicated region
      $region57: #{tpu_custom_call.1} parent=5 // pred_check
        %p577 = pneg %p576
      $region58: #{tpu_custom_call.1} parent=5 // pred_check_branch
        %579 = sbr.rel (%p577) target = $region60
      $region59: #{tpu_custom_call.1} parent=5 // pred_region
        %s580 = ssub.s32 %s19, 2
        // Predicated region
        $region61: #{tpu_custom_call.1} parent=59 // pred_check
          %p581 = pneg %p179
        $region62: #{tpu_custom_call.1} parent=59 // pred_check_branch
          %583 = sbr.rel (%p581) target = $region64
        $region63: #{tpu_custom_call.1} parent=59 // pred_region
          %s584 = sand.u32 %s164, 1
          %s585 = scalar_lea.sflag [#allocation4], %s584
          %s586 = sand.u32 %s164, 1
          %s587 = smul.addr %s586, 16
          %s588 = scalar_lea.vmem [#allocation7], %s587
          %590 = dma.done %s585, 256
        $region64: #{tpu_custom_call.1} parent=59 // pred_fallthru
          _
      $region60: #{tpu_custom_call.1} parent=5 // pred_fallthru
        _
    $region6: #{tpu_custom_call.1} parent=1 // loop_footer
      %s23 = sadd.s32 1, %s19
    $region7: #{tpu_custom_call.1} parent=1 // loop_footer_branch
      %18 = sbr.rel target = $region3
    $region8: #{tpu_custom_call.1} parent=1 // loop_exit
      _
    %591 = vsyncpa [#allocation3], 1
    %s592 = scalar_lea.sflag [#allocation3], 1
    %593 = vsyncpa %s592, 1
    %594 = vsyncpa [#allocation6], 1
    %595 = vsyncpa [#allocation4], 1
    %s596 = scalar_lea.sflag [#allocation4], 1
    %597 = vsyncpa %s596, 1

</llo_original>
